<compile_context>
chip_gen: v7x
topology: tpu7x:2x2x1
jax: 0.10.0
libtpu: 0.0.40
codegen_flags: <defaults>
</compile_context>

<pallas_src>
import math

import jax
import jax.numpy as jnp
from jax.experimental import pallas as pl
from jax.experimental.pallas import tpu as pltpu


def _make_policy_kernel(discrete: bool):
    def kernel(*refs):
        if discrete:
            (zs_ref, g_ref, w1_ref, b1_ref, w2_ref, b2_ref, w3_ref, b3_ref,
             act_ref, a_ref) = refs
        else:
            (zs_ref, w1_ref, b1_ref, w2_ref, b2_ref, w3_ref, b3_ref,
             act_ref, a_ref) = refs
            g_ref = None

        zs = zs_ref[...]
        h1 = jnp.maximum(
            jnp.dot(zs, w1_ref[...], preferred_element_type=jnp.float32)
            + b1_ref[...], 0.0)
        h2 = jnp.maximum(
            jnp.dot(h1, w2_ref[...], preferred_element_type=jnp.float32)
            + b2_ref[...], 0.0)
        logits = (jnp.dot(h2, w3_ref[...], preferred_element_type=jnp.float32)
                  + b3_ref[...])
        a_ref[...] = h2.astype(a_ref.dtype)

        if discrete:
            # Hard gumbel-softmax forward value: one-hot of argmax(logits + g).
            # (Softmax/tau dropped — monotone, does not change the argmax.)
            y = logits + g_ref[...]
            n = y.shape[-1]
            pmax = jnp.max(y, axis=-1, keepdims=True)
            iota = jax.lax.broadcasted_iota(jnp.int32, y.shape, dimension=1)
            # first-max tie-break on the raw scores (torch.argmax semantics)
            idx = jnp.min(jnp.where(y >= pmax, iota, n), axis=-1, keepdims=True)
            act_ref[...] = (iota == idx).astype(act_ref.dtype)
        else:
            act_ref[...] = jnp.tanh(logits).astype(act_ref.dtype)

    return kernel


def policy_network_forward(zs, params, *, discrete: bool, key=None,
                           gumbel_noise=None, tile_b: int = 256):
    """PolicyNetwork forward. Returns (final_activ(logits), a)."""
    w1, b1, w2, b2, w3, b3 = params
    batch, zs_dim = zs.shape
    hdim = w1.shape[1]
    action_dim = w3.shape[1]

    # Batch tile: multiple of 8 (f32 sublane); 256 rows when batch is large.
    if batch >= tile_b:
        tile = tile_b
    else:
        tile = max(8, ((batch + 7) // 8) * 8)
    num_tiles = pl.cdiv(batch, tile)
    padded = num_tiles * tile

    zs_p = zs if padded == batch else jnp.pad(zs, ((0, padded - batch), (0, 0)))

    inputs = [zs_p]
    row_spec = lambda d: pl.BlockSpec((tile, d), lambda i: (i, 0))
    in_specs = [row_spec(zs_dim)]

    if discrete:
        if gumbel_noise is None:
            if key is None:
                key = jax.random.PRNGKey(0)
            gumbel_noise = jax.random.gumbel(key, (batch, action_dim),
                                             jnp.float32)
        g_p = gumbel_noise
        if padded != batch:
            g_p = jnp.pad(g_p, ((0, padded - batch), (0, 0)))
        inputs.append(g_p)
        in_specs.append(row_spec(action_dim))

    # Weights / biases: full-array, VMEM-resident across all grid steps.
    full = lambda arr: pl.BlockSpec(arr.shape, lambda i: (0, 0))
    for arr in (w1, b1, w2, b2, w3, b3):
        inputs.append(arr)
        in_specs.append(full(arr))

    act_p, a_p = pl.pallas_call(
        _make_policy_kernel(discrete),
        out_shape=(jax.ShapeDtypeStruct((padded, action_dim), jnp.float32),
                   jax.ShapeDtypeStruct((padded, hdim), jnp.float32)),
        grid=(num_tiles,),
        in_specs=in_specs,
        out_specs=(row_spec(action_dim), row_spec(hdim)),
        compiler_params=pltpu.CompilerParams(
            dimension_semantics=("parallel",)),
    )(*inputs)

    return act_p[:batch], a_p[:batch]


def init_policy_params(key, zs_dim, policy_hdim, action_dim):
    """nn.Linear-style U(-1/sqrt(fan_in), 1/sqrt(fan_in)) init.
    Weights stored pre-transposed: (in_dim, out_dim); biases (1, out_dim)."""
    def linear(key, fan_in, fan_out):
        kw, kb = jax.random.split(key)
        bound = 1.0 / math.sqrt(fan_in)
        w = jax.random.uniform(kw, (fan_in, fan_out), jnp.float32, -bound, bound)
        b = jax.random.uniform(kb, (1, fan_out), jnp.float32, -bound, bound)
        return w, b

    k1, k2, k3 = jax.random.split(key, 3)
    w1, b1 = linear(k1, zs_dim, policy_hdim)
    w2, b2 = linear(k2, policy_hdim, policy_hdim)
    w3, b3 = linear(k3, policy_hdim, action_dim)
    return (w1, b1, w2, b2, w3, b3)


def _reference(zs, params):
    w1, b1, w2, b2, w3, b3 = params
    hi = jax.lax.Precision.HIGHEST
    h1 = jnp.maximum(jnp.dot(zs, w1, precision=hi) + b1, 0.0)
    h2 = jnp.maximum(jnp.dot(h1, w2, precision=hi) + b2, 0.0)
    logits = jnp.dot(h2, w3, precision=hi) + b3
    return logits, h2


if __name__ == "__main__":
    batch, zs_dim, policy_hdim, action_dim = 8, 32, 32, 8

    key = jax.random.PRNGKey(0)
    kzs, kparams, kg, kzs2 = jax.random.split(key, 4)
    zs = jax.random.normal(kzs, (batch, zs_dim), dtype=jnp.float32)
    params = init_policy_params(kparams, zs_dim, policy_hdim, action_dim)

    # --- Continuous head (tanh) ---
    act_c, a_c = policy_network_forward(zs, params, discrete=False)
    jax.block_until_ready(act_c)
    jax.block_until_ready(a_c)
    ref_logits, ref_a = _reference(zs, params)
    assert jnp.allclose(act_c, jnp.tanh(ref_logits), atol=1e-3), "tanh mismatch"
    assert jnp.allclose(a_c, ref_a, atol=1e-3), "hidden features mismatch"

    # --- Discrete head (hard gumbel-softmax forward value) ---
    g = jax.random.gumbel(kg, (batch, action_dim), jnp.float32)
    act_d, a_d = policy_network_forward(zs, params, discrete=True,
                                        gumbel_noise=g)
    jax.block_until_ready(act_d)
    jax.block_until_ready(a_d)
    assert jnp.allclose(jnp.sum(act_d, axis=-1), 1.0), "not one-hot"
    ref_idx = jnp.argmax(ref_logits + g, axis=-1)
    assert jnp.all(jnp.argmax(act_d, axis=-1) == ref_idx), "argmax mismatch"

    # --- Larger, non-multiple batch to exercise the batch grid + padding ---
    big_batch = 300
    zs_big = jax.random.normal(kzs2, (big_batch, zs_dim), dtype=jnp.float32)
    act_b, a_b = policy_network_forward(zs_big, params, discrete=False)
    jax.block_until_ready(act_b)
    ref_logits_b, ref_a_b = _reference(zs_big, params)
    assert act_b.shape == (big_batch, action_dim)
    assert jnp.allclose(act_b, jnp.tanh(ref_logits_b), atol=1e-3), "tiled mismatch"
    assert jnp.allclose(a_b, ref_a_b, atol=1e-3), "tiled hidden mismatch"

    print("KERNEL_OK")
</pallas_src>

<mosaic_0001>
module attributes {stable_mosaic.version = 11 : i64} {
  func.func @kernel(%arg0: i32, %arg1: memref<8x32xf32, #tpu.memory_space<vmem>>, %arg2: memref<32x32xf32, #tpu.memory_space<vmem>>, %arg3: memref<1x32xf32, #tpu.memory_space<vmem>>, %arg4: memref<32x32xf32, #tpu.memory_space<vmem>>, %arg5: memref<1x32xf32, #tpu.memory_space<vmem>>, %arg6: memref<32x8xf32, #tpu.memory_space<vmem>>, %arg7: memref<1x8xf32, #tpu.memory_space<vmem>>, %arg8: memref<8x8xf32, #tpu.memory_space<vmem>>, %arg9: memref<8x32xf32, #tpu.memory_space<vmem>>) attributes {dimension_semantics = [#tpu.dimension_semantics<parallel>], iteration_bounds = array<i64: 1>, scalar_prefetch = 0 : i64, scratch_operands = 0 : i64, tpu.core_type = #tpu.core_type<tc>, window_params = [{transform_indices = @transform_0, window_bounds = array<i64: 8, 32>}, {pipeline_mode = #tpu.pipeline_mode<synchronous>, transform_indices = @transform_1, window_bounds = array<i64: 32, 32>}, {pipeline_mode = #tpu.pipeline_mode<synchronous>, transform_indices = @transform_2, window_bounds = array<i64: 1, 32>}, {pipeline_mode = #tpu.pipeline_mode<synchronous>, transform_indices = @transform_3, window_bounds = array<i64: 32, 32>}, {pipeline_mode = #tpu.pipeline_mode<synchronous>, transform_indices = @transform_4, window_bounds = array<i64: 1, 32>}, {pipeline_mode = #tpu.pipeline_mode<synchronous>, transform_indices = @transform_5, window_bounds = array<i64: 32, 8>}, {pipeline_mode = #tpu.pipeline_mode<synchronous>, transform_indices = @transform_6, window_bounds = array<i64: 1, 8>}, {transform_indices = @transform_7, window_bounds = array<i64: 8, 8>}, {transform_indices = @transform_8, window_bounds = array<i64: 8, 32>}]} {
    %c0 = arith.constant 0 : index
    %c0_0 = arith.constant 0 : index
    %0 = vector.load %arg1[%c0, %c0_0] : memref<8x32xf32, #tpu.memory_space<vmem>>, vector<8x32xf32>
    %c0_1 = arith.constant 0 : index
    %c0_2 = arith.constant 0 : index
    %1 = vector.load %arg2[%c0_1, %c0_2] : memref<32x32xf32, #tpu.memory_space<vmem>>, vector<32x32xf32>
    %cst = arith.constant dense<0.000000e+00> : vector<8x32xf32>
    %2 = tpu.matmul %0, %1, %cst {dimension_numbers = #tpu.dot_dimension_numbers<[1], [0], [0], [1], [0, 0, 1, 1], [], []>} : vector<8x32xf32>, vector<32x32xf32>, vector<8x32xf32> -> vector<8x32xf32>
    %c0_3 = arith.constant 0 : index
    %c0_4 = arith.constant 0 : index
    %3 = vector.load %arg3[%c0_3, %c0_4] : memref<1x32xf32, #tpu.memory_space<vmem>>, vector<1x32xf32>
    %4 = vector.broadcast %3 : vector<1x32xf32> to vector<8x32xf32>
    %5 = arith.addf %2, %4 : vector<8x32xf32>
    %cst_5 = arith.constant 0.000000e+00 : f32
    %6 = vector.broadcast %cst_5 : f32 to vector<8x32xf32>
    %7 = arith.maximumf %5, %6 : vector<8x32xf32>
    %c0_6 = arith.constant 0 : index
    %c0_7 = arith.constant 0 : index
    %8 = vector.load %arg4[%c0_6, %c0_7] : memref<32x32xf32, #tpu.memory_space<vmem>>, vector<32x32xf32>
    %cst_8 = arith.constant dense<0.000000e+00> : vector<8x32xf32>
    %9 = tpu.matmul %7, %8, %cst_8 {dimension_numbers = #tpu.dot_dimension_numbers<[1], [0], [0], [1], [0, 0, 1, 1], [], []>} : vector<8x32xf32>, vector<32x32xf32>, vector<8x32xf32> -> vector<8x32xf32>
    %c0_9 = arith.constant 0 : index
    %c0_10 = arith.constant 0 : index
    %10 = vector.load %arg5[%c0_9, %c0_10] : memref<1x32xf32, #tpu.memory_space<vmem>>, vector<1x32xf32>
    %11 = vector.broadcast %10 : vector<1x32xf32> to vector<8x32xf32>
    %12 = arith.addf %9, %11 : vector<8x32xf32>
    %cst_11 = arith.constant 0.000000e+00 : f32
    %13 = vector.broadcast %cst_11 : f32 to vector<8x32xf32>
    %14 = arith.maximumf %12, %13 : vector<8x32xf32>
    %c0_12 = arith.constant 0 : index
    %c0_13 = arith.constant 0 : index
    %15 = vector.load %arg6[%c0_12, %c0_13] : memref<32x8xf32, #tpu.memory_space<vmem>>, vector<32x8xf32>
    %cst_14 = arith.constant dense<0.000000e+00> : vector<8x8xf32>
    %16 = tpu.matmul %14, %15, %cst_14 {dimension_numbers = #tpu.dot_dimension_numbers<[1], [0], [0], [1], [0, 0, 1, 1], [], []>} : vector<8x32xf32>, vector<32x8xf32>, vector<8x8xf32> -> vector<8x8xf32>
    %c0_15 = arith.constant 0 : index
    %c0_16 = arith.constant 0 : index
    %17 = vector.load %arg7[%c0_15, %c0_16] : memref<1x8xf32, #tpu.memory_space<vmem>>, vector<1x8xf32>
    %18 = vector.broadcast %17 : vector<1x8xf32> to vector<8x8xf32>
    %19 = arith.addf %16, %18 : vector<8x8xf32>
    %c0_17 = arith.constant 0 : index
    %c0_18 = arith.constant 0 : index
    %20 = vector.load %arg9[%c0_17, %c0_18] : memref<8x32xf32, #tpu.memory_space<vmem>>, vector<8x32xf32>
    tpu.vector_store %arg9[%c0_17, %c0_18], %14 {strides = array<i32>} : memref<8x32xf32, #tpu.memory_space<vmem>>, vector<8x32xf32>,
    %21 = math.tanh %19 : vector<8x8xf32>
    %c0_19 = arith.constant 0 : index
    %c0_20 = arith.constant 0 : index
    %22 = vector.load %arg8[%c0_19, %c0_20] : memref<8x8xf32, #tpu.memory_space<vmem>>, vector<8x8xf32>
    tpu.vector_store %arg8[%c0_19, %c0_20], %21 {strides = array<i32>} : memref<8x8xf32, #tpu.memory_space<vmem>>, vector<8x8xf32>,
    return
  }
  func.func @transform_0(%arg0: i32) -> (i32, i32) {
    %c0_i32 = arith.constant 0 : i32
    %c0_i32_0 = arith.constant 0 : i32
    return %arg0, %c0_i32 : i32, i32
  }
  func.func @transform_1(%arg0: i32) -> (i32, i32) {
    %c0_i32 = arith.constant 0 : i32
    %c0_i32_0 = arith.constant 0 : i32
    %c0_i32_1 = arith.constant 0 : i32
    return %c0_i32, %c0_i32_0 : i32, i32
  }
  func.func @transform_2(%arg0: i32) -> (i32, i32) {
    %c0_i32 = arith.constant 0 : i32
    %c0_i32_0 = arith.constant 0 : i32
    %c0_i32_1 = arith.constant 0 : i32
    return %c0_i32, %c0_i32_0 : i32, i32
  }
  func.func @transform_3(%arg0: i32) -> (i32, i32) {
    %c0_i32 = arith.constant 0 : i32
    %c0_i32_0 = arith.constant 0 : i32
    %c0_i32_1 = arith.constant 0 : i32
    return %c0_i32, %c0_i32_0 : i32, i32
  }
  func.func @transform_4(%arg0: i32) -> (i32, i32) {
    %c0_i32 = arith.constant 0 : i32
    %c0_i32_0 = arith.constant 0 : i32
    %c0_i32_1 = arith.constant 0 : i32
    return %c0_i32, %c0_i32_0 : i32, i32
  }
  func.func @transform_5(%arg0: i32) -> (i32, i32) {
    %c0_i32 = arith.constant 0 : i32
    %c0_i32_0 = arith.constant 0 : i32
    %c0_i32_1 = arith.constant 0 : i32
    return %c0_i32, %c0_i32_0 : i32, i32
  }
  func.func @transform_6(%arg0: i32) -> (i32, i32) {
    %c0_i32 = arith.constant 0 : i32
    %c0_i32_0 = arith.constant 0 : i32
    %c0_i32_1 = arith.constant 0 : i32
    return %c0_i32, %c0_i32_0 : i32, i32
  }
  func.func @transform_7(%arg0: i32) -> (i32, i32) {
    %c0_i32 = arith.constant 0 : i32
    %c0_i32_0 = arith.constant 0 : i32
    return %arg0, %c0_i32 : i32, i32
  }
  func.func @transform_8(%arg0: i32) -> (i32, i32) {
    %c0_i32 = arith.constant 0 : i32
    %c0_i32_0 = arith.constant 0 : i32
    return %arg0, %c0_i32 : i32, i32
  }
}

</mosaic_0001>

<llo_original>
// kernel: tpu_custom_call.1
$region0: #{tpu_custom_call.1}
  #allocation0 [shape = 'u32[]', space=smem, size = 0x4, offset = 0x4, fixed_abs, tag = 'smem constant byte address 0x4 - core index']
  #allocation1 [shape = 'u32[144,128]{1,0:T(1,128)}', space=vmem, size = 0x12000, scoped, tag = 'internal scratch']
  %s0 = inlined_call_operand.vmem [shape: f32[8,32], index: 0, kind: input, shape index: {}]
  %s1 = inlined_call_operand.vmem [shape: f32[32,32], index: 1, kind: input, shape index: {}]
  %s2 = inlined_call_operand.vmem [shape: f32[1,32], index: 2, kind: input, shape index: {}]
  %s3 = inlined_call_operand.hbm [shape: f32[32,32], index: 3, kind: input, shape index: {}]
  %s4 = inlined_call_operand.vmem [shape: f32[1,32], index: 4, kind: input, shape index: {}]
  %s5 = inlined_call_operand.vmem [shape: f32[32,8], index: 5, kind: input, shape index: {}]
  %s6 = inlined_call_operand.vmem [shape: f32[1,8], index: 6, kind: input, shape index: {}]
  %s7 = inlined_call_operand.hbm [shape: f32[8,8], index: 7, kind: output, shape index: {0}]
  %s8 = inlined_call_operand.hbm [shape: f32[8,32], index: 8, kind: output, shape index: {1}]
  %9 = xla_tuple %s7, %s8
  %s10 = sld [smem:[#allocation0]]
  $region50: #{tpu_custom_call.1} parent=0
    _
  %s12 = ssub.s32 1, %s10
  %s13 = scalar_select 0, %s12, %s10
  $region1: #{tpu_custom_call.1} parent=0
    #allocation2 [shape = 'u8[16384]{0}', space=vmem, size = 0x4000, scoped, tag = 'input window, operand 3, single buffered']
    #allocation3 [shape = 's32[1]{0}', space=sflag, size = 0x4, scoped, tag = 'scoped memory for tpu_custom_call.1']
    #allocation4 [shape = 's32[1]{0}', space=sflag, size = 0x4, scoped, tag = 'scoped memory for tpu_custom_call.1']
    #allocation5 [shape = 'u8[4096]{0}', space=vmem, size = 0x1000, scoped, tag = 'output window, operand 0, single buffered']
    #allocation6 [shape = 'u8[4096]{0}', space=vmem, size = 0x1000, scoped, tag = 'output window, operand 1, single buffered']
    #allocation7 [shape = 's32[1]{0}', space=sflag, size = 0x4, scoped, tag = 'scoped memory for tpu_custom_call.1']
    %14 = vsyncpa [#allocation3], 0
    %15 = vsyncpa [#allocation4], 0
    %16 = vsyncpa [#allocation7], 0
    // Predicated region
    $region2: #{tpu_custom_call.1} parent=1 // pred_check
      _
    $region3: #{tpu_custom_call.1} parent=1 // pred_check_branch
      %18 = sbr.rel (0) target = $region5
    $region4: #{tpu_custom_call.1} parent=1 // pred_region
      _
    $region5: #{tpu_custom_call.1} parent=1 // pred_fallthru
      _
    // Predicated region
    $region6: #{tpu_custom_call.1} parent=1 // pred_check
      _
    $region7: #{tpu_custom_call.1} parent=1 // pred_check_branch
      %20 = sbr.rel (0) target = $region9
    $region8: #{tpu_custom_call.1} parent=1 // pred_region
      _
    $region9: #{tpu_custom_call.1} parent=1 // pred_fallthru
      _
    // Predicated region
    $region10: #{tpu_custom_call.1} parent=1 // pred_check
      _
    $region11: #{tpu_custom_call.1} parent=1 // pred_check_branch
      %22 = sbr.rel (0) target = $region13
    $region12: #{tpu_custom_call.1} parent=1 // pred_region
      _
    $region13: #{tpu_custom_call.1} parent=1 // pred_fallthru
      _
    // Predicated region
    $region14: #{tpu_custom_call.1} parent=1 // pred_check
      _
    $region15: #{tpu_custom_call.1} parent=1 // pred_check_branch
      %24 = sbr.rel (0) target = $region17
    $region16: #{tpu_custom_call.1} parent=1 // pred_region
      %s26 = ssub.s32 512, 512
      %27 = vsyncadd [#allocation3], %s26
      %s28 = sshll.u32 [#allocation2], 4
      %s29 = int_to_ptr.vmem [resolvable:$true] %s28
      %34 = dma.hbm_to_vmem [thread:$0]  %s3, 512, %s29, [#allocation3], 128, 128, 8
    $region17: #{tpu_custom_call.1} parent=1 // pred_fallthru
      _
    // Predicated region
    $region18: #{tpu_custom_call.1} parent=1 // pred_check
      _
    $region19: #{tpu_custom_call.1} parent=1 // pred_check_branch
      %36 = sbr.rel (0) target = $region21
    $region20: #{tpu_custom_call.1} parent=1 // pred_region
      _
    $region21: #{tpu_custom_call.1} parent=1 // pred_fallthru
      _
    // Predicated region
    $region22: #{tpu_custom_call.1} parent=1 // pred_check
      _
    $region23: #{tpu_custom_call.1} parent=1 // pred_check_branch
      %38 = sbr.rel (0) target = $region25
    $region24: #{tpu_custom_call.1} parent=1 // pred_region
      _
    $region25: #{tpu_custom_call.1} parent=1 // pred_fallthru
      _
    // Predicated region
    $region26: #{tpu_custom_call.1} parent=1 // pred_check
      _
    $region27: #{tpu_custom_call.1} parent=1 // pred_check_branch
      %40 = sbr.rel (0) target = $region29
    $region28: #{tpu_custom_call.1} parent=1 // pred_region
      _
    $region29: #{tpu_custom_call.1} parent=1 // pred_fallthru
      _
    // Predicated region
    $region30: #{tpu_custom_call.1} parent=1 // pred_check
      _
    $region31: #{tpu_custom_call.1} parent=1 // pred_check_branch
      %42 = sbr.rel (0) target = $region33
    $region32: #{tpu_custom_call.1} parent=1 // pred_region
      %43 = dma.done [#allocation3], 512
    $region33: #{tpu_custom_call.1} parent=1 // pred_fallthru
      _
    %v44 = vld [vmem:[%s0] sm:$0xff]
    %v45 = vld [vmem:[%s1] sm:$0xff]
    %v46 = vld [vmem:[%s1 + $0x8] sm:$0xff]
    %v47 = vld [vmem:[%s1 + $0x10] sm:$0xff]
    %v48 = vld [vmem:[%s1 + $0x18] sm:$0xff]
    %v49 = vld [vmem:[%s2] sm:$0x1]
    %v51 = vlaneseq
    %v52 = vshrl.u32 %v51, 7
    %v53 = vsub.s32 0, %v52
    %v54 = vrot.slane %v49, %v53
    %vm56 = vcmask 261120
    %v58 = vsel %vm56, %v44, 0
    %60 = vmatprep.subr.mxu0 0.0
    %61 = vmatpush1.msra.mxu0 %v45
    %62 = vmatprep.subr.mxu0 0.0
    %63 = vmatpush1.msra.mxu0 %v46
    %64 = vmatprep.subr.mxu0 0.0
    %65 = vmatpush1.msra.mxu0 %v47
    %66 = vmatprep.subr.mxu0 0.0
    %67 = vmatpush1.msra.mxu0 %v48
    %68 = vmatprep.subr.mxu0 0.0
    %69 = vmatpush1.msra.mxu0 0.0
    %70 = vmatprep.subr.mxu0 0.0
    %71 = vmatpush1.msra.mxu0 0.0
    %72 = vmatprep.subr.mxu0 0.0
    %73 = vmatpush1.msra.mxu0 0.0
    %74 = vmatprep.subr.mxu0 0.0
    %75 = vmatpush1.msra.mxu0 0.0
    %76 = vmatprep.subr.mxu0 0.0
    %77 = vmatpush1.msra.mxu0 0.0
    %78 = vmatprep.subr.mxu0 0.0
    %79 = vmatpush1.msra.mxu0 0.0
    %80 = vmatprep.subr.mxu0 0.0
    %81 = vmatpush1.msra.mxu0 0.0
    %82 = vmatprep.subr.mxu0 0.0
    %83 = vmatpush1.msra.mxu0 0.0
    %84 = vmatprep.subr.mxu0 0.0
    %85 = vmatpush1.msra.mxu0 0.0
    %86 = vmatprep.subr.mxu0 0.0
    %87 = vmatpush1.msra.mxu0 0.0
    %88 = vmatprep.subr.mxu0 0.0
    %89 = vmatpush1.msra.mxu0 0.0
    %90 = vmatprep.subr.mxu0 0.0
    %91 = vmatpush1.msra.mxu0 0.0
    %92 = vmatprep.subr.mxu0 0.0
    %93 = vmatpush1.msra.mxu0 0.0
    %94 = vmatprep.subr.mxu0 0.0
    %95 = vmatpush1.msra.mxu0 0.0
    %96 = vmatprep.subr.mxu0 0.0
    %97 = vmatpush1.msra.mxu0 0.0
    %98 = vmatprep.subr.mxu0 0.0
    %99 = vmatpush1.msra.mxu0 0.0
    %100 = vmatprep.subr.mxu0 0.0
    %101 = vmatpush1.msra.mxu0 0.0
    %102 = vmatprep.subr.mxu0 0.0
    %103 = vmatpush1.msra.mxu0 0.0
    %104 = vmatprep.subr.mxu0 0.0
    %105 = vmatpush1.msra.mxu0 0.0
    %106 = vmatprep.subr.mxu0 0.0
    %107 = vmatpush1.msra.mxu0 0.0
    %108 = vmatprep.subr.mxu0 0.0
    %109 = vmatpush1.msra.mxu0 0.0
    %110 = vmatprep.subr.mxu0 0.0
    %111 = vmatpush1.msra.mxu0 0.0
    %112 = vmatprep.subr.mxu0 0.0
    %113 = vmatpush1.msra.mxu0 0.0
    %114 = vmatprep.subr.mxu0 0.0
    %115 = vmatpush1.msra.mxu0 0.0
    %116 = vmatprep.subr.mxu0 0.0
    %117 = vmatpush1.msra.mxu0 0.0
    %118 = vmatprep.subr.mxu0 0.0
    %119 = vmatpush1.msra.mxu0 0.0
    %120 = vmatprep.subr.mxu0 0.0
    %121 = vmatpush1.msra.mxu0 0.0
    %122 = vmatprep.subr.mxu0 0.0
    %123 = vmatpush1.msra.mxu0 0.0
    %124 = vmatprep.mubr.f32.mxu0 0.0
    %125 = vmatmul.mubr.f32.gmra.mrb[0].mxu0 %v58
    %v126 = vpop.f32.mrb[0].mxu0
    %v127 = vadd.f32 %v54, %v126
    %v128 = vpop.f32.mrb[0].mxu0
    %129 = vdwg.mxu0
    %v130 = vmax.f32 %v127, 0.0
    %v131 = vld [vmem:[#allocation2] sm:$0xff]
    %v132 = vld [vmem:[#allocation2 + $0x8] sm:$0xff]
    %v133 = vld [vmem:[#allocation2 + $0x10] sm:$0xff]
    %v134 = vld [vmem:[#allocation2 + $0x18] sm:$0xff]
    %v135 = vld [vmem:[%s4] sm:$0x1]
    %v137 = vlaneseq
    %v138 = vshrl.u32 %v137, 7
    %v139 = vsub.s32 0, %v138
    %v140 = vrot.slane %v135, %v139
    %v143 = vsel %vm56, %v130, 0
    %145 = vmatprep.subr.mxu0 0.0
    %146 = vmatpush1.msra.mxu0 %v131
    %147 = vmatprep.subr.mxu0 0.0
    %148 = vmatpush1.msra.mxu0 %v132
    %149 = vmatprep.subr.mxu0 0.0
    %150 = vmatpush1.msra.mxu0 %v133
    %151 = vmatprep.subr.mxu0 0.0
    %152 = vmatpush1.msra.mxu0 %v134
    %153 = vmatprep.subr.mxu0 0.0
    %154 = vmatpush1.msra.mxu0 0.0
    %155 = vmatprep.subr.mxu0 0.0
    %156 = vmatpush1.msra.mxu0 0.0
    %157 = vmatprep.subr.mxu0 0.0
    %158 = vmatpush1.msra.mxu0 0.0
    %159 = vmatprep.subr.mxu0 0.0
    %160 = vmatpush1.msra.mxu0 0.0
    %161 = vmatprep.subr.mxu0 0.0
    %162 = vmatpush1.msra.mxu0 0.0
    %163 = vmatprep.subr.mxu0 0.0
    %164 = vmatpush1.msra.mxu0 0.0
    %165 = vmatprep.subr.mxu0 0.0
    %166 = vmatpush1.msra.mxu0 0.0
    %167 = vmatprep.subr.mxu0 0.0
    %168 = vmatpush1.msra.mxu0 0.0
    %169 = vmatprep.subr.mxu0 0.0
    %170 = vmatpush1.msra.mxu0 0.0
    %171 = vmatprep.subr.mxu0 0.0
    %172 = vmatpush1.msra.mxu0 0.0
    %173 = vmatprep.subr.mxu0 0.0
    %174 = vmatpush1.msra.mxu0 0.0
    %175 = vmatprep.subr.mxu0 0.0
    %176 = vmatpush1.msra.mxu0 0.0
    %177 = vmatprep.subr.mxu0 0.0
    %178 = vmatpush1.msra.mxu0 0.0
    %179 = vmatprep.subr.mxu0 0.0
    %180 = vmatpush1.msra.mxu0 0.0
    %181 = vmatprep.subr.mxu0 0.0
    %182 = vmatpush1.msra.mxu0 0.0
    %183 = vmatprep.subr.mxu0 0.0
    %184 = vmatpush1.msra.mxu0 0.0
    %185 = vmatprep.subr.mxu0 0.0
    %186 = vmatpush1.msra.mxu0 0.0
    %187 = vmatprep.subr.mxu0 0.0
    %188 = vmatpush1.msra.mxu0 0.0
    %189 = vmatprep.subr.mxu0 0.0
    %190 = vmatpush1.msra.mxu0 0.0
    %191 = vmatprep.subr.mxu0 0.0
    %192 = vmatpush1.msra.mxu0 0.0
    %193 = vmatprep.subr.mxu0 0.0
    %194 = vmatpush1.msra.mxu0 0.0
    %195 = vmatprep.subr.mxu0 0.0
    %196 = vmatpush1.msra.mxu0 0.0
    %197 = vmatprep.subr.mxu0 0.0
    %198 = vmatpush1.msra.mxu0 0.0
    %199 = vmatprep.subr.mxu0 0.0
    %200 = vmatpush1.msra.mxu0 0.0
    %201 = vmatprep.subr.mxu0 0.0
    %202 = vmatpush1.msra.mxu0 0.0
    %203 = vmatprep.subr.mxu0 0.0
    %204 = vmatpush1.msra.mxu0 0.0
    %205 = vmatprep.subr.mxu0 0.0
    %206 = vmatpush1.msra.mxu0 0.0
    %207 = vmatprep.subr.mxu0 0.0
    %208 = vmatpush1.msra.mxu0 0.0
    %209 = vmatprep.mubr.f32.mxu0 0.0
    %210 = vmatmul.mubr.f32.gmra.mrb[0].mxu0 %v143
    %v211 = vpop.f32.mrb[0].mxu0
    %v212 = vadd.f32 %v140, %v211
    %v213 = vpop.f32.mrb[0].mxu0
    %214 = vdwg.mxu0
    %v215 = vmax.f32 %v212, 0.0
    %v216 = vld [vmem:[%s5] sm:$0xff]
    %v217 = vld [vmem:[%s5 + $0x8] sm:$0xff]
    %v218 = vld [vmem:[%s5 + $0x10] sm:$0xff]
    %v219 = vld [vmem:[%s5 + $0x18] sm:$0xff]
    %v220 = vld [vmem:[%s6] sm:$0x1]
    %v222 = vlaneseq
    %v223 = vshrl.u32 %v222, 7
    %v224 = vsub.s32 0, %v223
    %v225 = vrot.slane %v220, %v224
    %v228 = vsel %vm56, %v215, 0
    %230 = vmatprep.subr.mxu0 0.0
    %231 = vmatpush1.msra.mxu0 %v216
    %232 = vmatprep.subr.mxu0 0.0
    %233 = vmatpush1.msra.mxu0 %v217
    %234 = vmatprep.subr.mxu0 0.0
    %235 = vmatpush1.msra.mxu0 %v218
    %236 = vmatprep.subr.mxu0 0.0
    %237 = vmatpush1.msra.mxu0 %v219
    %238 = vmatprep.subr.mxu0 0.0
    %239 = vmatpush1.msra.mxu0 0.0
    %240 = vmatprep.subr.mxu0 0.0
    %241 = vmatpush1.msra.mxu0 0.0
    %242 = vmatprep.subr.mxu0 0.0
    %243 = vmatpush1.msra.mxu0 0.0
    %244 = vmatprep.subr.mxu0 0.0
    %245 = vmatpush1.msra.mxu0 0.0
    %246 = vmatprep.subr.mxu0 0.0
    %247 = vmatpush1.msra.mxu0 0.0
    %248 = vmatprep.subr.mxu0 0.0
    %249 = vmatpush1.msra.mxu0 0.0
    %250 = vmatprep.subr.mxu0 0.0
    %251 = vmatpush1.msra.mxu0 0.0
    %252 = vmatprep.subr.mxu0 0.0
    %253 = vmatpush1.msra.mxu0 0.0
    %254 = vmatprep.subr.mxu0 0.0
    %255 = vmatpush1.msra.mxu0 0.0
    %256 = vmatprep.subr.mxu0 0.0
    %257 = vmatpush1.msra.mxu0 0.0
    %258 = vmatprep.subr.mxu0 0.0
    %259 = vmatpush1.msra.mxu0 0.0
    %260 = vmatprep.subr.mxu0 0.0
    %261 = vmatpush1.msra.mxu0 0.0
    %262 = vmatprep.subr.mxu0 0.0
    %263 = vmatpush1.msra.mxu0 0.0
    %264 = vmatprep.subr.mxu0 0.0
    %265 = vmatpush1.msra.mxu0 0.0
    %266 = vmatprep.subr.mxu0 0.0
    %267 = vmatpush1.msra.mxu0 0.0
    %268 = vmatprep.subr.mxu0 0.0
    %269 = vmatpush1.msra.mxu0 0.0
    %270 = vmatprep.subr.mxu0 0.0
    %271 = vmatpush1.msra.mxu0 0.0
    %272 = vmatprep.subr.mxu0 0.0
    %273 = vmatpush1.msra.mxu0 0.0
    %274 = vmatprep.subr.mxu0 0.0
    %275 = vmatpush1.msra.mxu0 0.0
    %276 = vmatprep.subr.mxu0 0.0
    %277 = vmatpush1.msra.mxu0 0.0
    %278 = vmatprep.subr.mxu0 0.0
    %279 = vmatpush1.msra.mxu0 0.0
    %280 = vmatprep.subr.mxu0 0.0
    %281 = vmatpush1.msra.mxu0 0.0
    %282 = vmatprep.subr.mxu0 0.0
    %283 = vmatpush1.msra.mxu0 0.0
    %284 = vmatprep.subr.mxu0 0.0
    %285 = vmatpush1.msra.mxu0 0.0
    %286 = vmatprep.subr.mxu0 0.0
    %287 = vmatpush1.msra.mxu0 0.0
    %288 = vmatprep.subr.mxu0 0.0
    %289 = vmatpush1.msra.mxu0 0.0
    %290 = vmatprep.subr.mxu0 0.0
    %291 = vmatpush1.msra.mxu0 0.0
    %292 = vmatprep.subr.mxu0 0.0
    %293 = vmatpush1.msra.mxu0 0.0
    %294 = vmatprep.mubr.f32.mxu0 0.0
    %295 = vmatmul.mubr.f32.gmra.mrb[0].mxu0 %v228
    %v296 = vpop.f32.mrb[0].mxu0
    %v297 = vadd.f32 %v225, %v296
    %v298 = vpop.f32.mrb[0].mxu0
    %299 = vdwg.mxu0
    %300 = vst.msk [vmem:[#allocation6] sm:$0xff] %vm56, %v215
    %v301 = vtanh.pop %v297
    %vm302 = vcmask 64512
    %303 = vst.msk [vmem:[#allocation5] sm:$0xff] %vm302, %v301
    // Predicated region
    $region34: #{tpu_custom_call.1} parent=1 // pred_check
      _
    $region35: #{tpu_custom_call.1} parent=1 // pred_check_branch
      %305 = sbr.rel (0) target = $region37
    $region36: #{tpu_custom_call.1} parent=1 // pred_region
      %s307 = ssub.s32 128, 128
      %308 = vsyncadd [#allocation4], %s307
      %s310 = sshll.u32 [#allocation5], 4
      %s311 = int_to_ptr.vmem [resolvable:$true] %s310
      %313 = dma.vmem_to_hbm [thread:$0]  %s311, 128, %s7, [#allocation4]
    $region37: #{tpu_custom_call.1} parent=1 // pred_fallthru
      _
    // Predicated region
    $region38: #{tpu_custom_call.1} parent=1 // pred_check
      _
    $region39: #{tpu_custom_call.1} parent=1 // pred_check_branch
      %315 = sbr.rel (0) target = $region41
    $region40: #{tpu_custom_call.1} parent=1 // pred_region
      %s317 = ssub.s32 128, 128
      %318 = vsyncadd [#allocation7], %s317
      %s320 = sshll.u32 [#allocation6], 4
      %s321 = int_to_ptr.vmem [resolvable:$true] %s320
      %323 = dma.vmem_to_hbm [thread:$0]  %s321, 128, %s8, [#allocation7]
    $region41: #{tpu_custom_call.1} parent=1 // pred_fallthru
      _
    // Predicated region
    $region42: #{tpu_custom_call.1} parent=1 // pred_check
      _
    $region43: #{tpu_custom_call.1} parent=1 // pred_check_branch
      %325 = sbr.rel (0) target = $region45
    $region44: #{tpu_custom_call.1} parent=1 // pred_region
      %326 = dma.done [#allocation4], 128
    $region45: #{tpu_custom_call.1} parent=1 // pred_fallthru
      _
    // Predicated region
    $region46: #{tpu_custom_call.1} parent=1 // pred_check
      _
    $region47: #{tpu_custom_call.1} parent=1 // pred_check_branch
      %328 = sbr.rel (0) target = $region49
    $region48: #{tpu_custom_call.1} parent=1 // pred_region
      %329 = dma.done [#allocation7], 128
    $region49: #{tpu_custom_call.1} parent=1 // pred_fallthru
      _
    %330 = vsyncpa [#allocation3], 1
    %331 = vsyncpa [#allocation4], 1
    %332 = vsyncpa [#allocation7], 1

</llo_original>
